<compile_context>
chip_gen: v7x
topology: tpu7x:2x2x1
jax: 0.10.0
libtpu: 0.0.40
codegen_flags: <defaults>
</compile_context>

<pallas_src>
import math
import functools

import jax
import jax.numpy as jnp
from jax import lax
from jax.experimental import pallas as pl
from jax.experimental.pallas import tpu as pltpu


_MASK_VALUE = float(jnp.finfo(jnp.float32).min)


def _tile(dim, desired, align):
    """Largest multiple of `align` that divides `dim` and is <= desired, else full dim."""
    t = min(desired, dim)
    t -= t % align
    while t >= align:
        if dim % t == 0:
            return t
        t -= align
    return dim  # full extent is always a legal block


# ----------------------------------------------------------------------------
# Tiled linear kernel:  y = x @ W_t + b     (W_t is the already-transposed weight)
# grid = (M/tm, N/tn, K/tk), bf16 MXU operands, f32 VMEM accumulator.
# ----------------------------------------------------------------------------
def _matmul_bias_kernel(x_ref, w_ref, b_ref, o_ref, acc_ref):
    k = pl.program_id(2)

    @pl.when(k == 0)
    def _():
        acc_ref[...] = jnp.zeros(acc_ref.shape, jnp.float32)

    # bf16 operands for MXU peak; accumulate in f32.
    acc_ref[...] += jnp.dot(x_ref[...].astype(jnp.bfloat16),
                            w_ref[...].astype(jnp.bfloat16),
                            preferred_element_type=jnp.float32)

    @pl.when(k == pl.num_programs(2) - 1)
    def _():
        o_ref[...] = (acc_ref[...] + b_ref[...]).astype(o_ref.dtype)


def linear(x2d, w_t, b, *, bm=256, bn=256, bk=512):
    """x2d: (M, K), w_t: (K, N), b: (N,) -> (M, N)."""
    M, K = x2d.shape
    _, N = w_t.shape
    tm = _tile(M, bm, 8)
    tn = _tile(N, bn, 128)
    tk = _tile(K, bk, 128)
    b2d = b.reshape(1, N)
    return pl.pallas_call(
        _matmul_bias_kernel,
        out_shape=jax.ShapeDtypeStruct((M, N), x2d.dtype),
        grid_spec=pltpu.PrefetchScalarGridSpec(
            num_scalar_prefetch=0,
            grid=(M // tm, N // tn, K // tk),
            in_specs=[
                pl.BlockSpec((tm, tk), lambda i, j, k: (i, k)),
                pl.BlockSpec((tk, tn), lambda i, j, k: (k, j)),
                pl.BlockSpec((1, tn), lambda i, j, k: (0, j)),
            ],
            out_specs=pl.BlockSpec((tm, tn), lambda i, j, k: (i, j)),
            scratch_shapes=[pltpu.VMEM((tm, tn), jnp.float32)],
        ),
        compiler_params=pltpu.CompilerParams(
            dimension_semantics=("parallel", "parallel", "arbitrary")),
    )(x2d, w_t, b2d)


# ----------------------------------------------------------------------------
# Flash-style causal self-attention on the flat fused-qkv layout.
#   qkv: (B*S, 3E) with columns [q | k | v];  output: (B*S, E)
#   grid = (B, S/tq, S/tkv); kv is the innermost (reduction) axis.
# All heads of a q block are handled per grid step (lane-dense E-wide blocks);
# the per-head math is an unrolled static loop over D-wide column slices.
# ----------------------------------------------------------------------------
def _flash_attn_kernel(q_ref, k_ref, v_ref, o_ref, m_ref, l_ref, acc_ref,
                       *, scale, block_q, block_kv, num_heads, head_dim):
    qi = pl.program_id(1)
    ki = pl.program_id(2)

    q_lo = qi * block_q                 # smallest query row of this block
    q_hi = q_lo + (block_q - 1)         # largest query row
    k_lo = ki * block_kv                # smallest key column
    k_hi = k_lo + (block_kv - 1)        # largest key column

    @pl.when(ki == 0)
    def _():
        m_ref[...] = jnp.full(m_ref.shape, _MASK_VALUE, jnp.float32)
        l_ref[...] = jnp.zeros(l_ref.shape, jnp.float32)
        acc_ref[...] = jnp.zeros(acc_ref.shape, jnp.float32)

    def _online_softmax_update(apply_mask):
        if apply_mask:
            row = q_lo + lax.broadcasted_iota(jnp.int32, (block_q, block_kv), 0)
            col = k_lo + lax.broadcasted_iota(jnp.int32, (block_q, block_kv), 1)
            keep = col <= row
        for h in range(num_heads):
            c0 = h * head_dim
            c1 = c0 + head_dim
            q = q_ref[:, c0:c1].astype(jnp.bfloat16)        # (tq, D)
            k = k_ref[:, c0:c1].astype(jnp.bfloat16)        # (tkv, D)
            # QK^T without materializing a transpose (contract last dims).
            s = lax.dot_general(q, k, (((1,), (1,)), ((), ())),
                                preferred_element_type=jnp.float32) * scale
            if apply_mask:
                s = jnp.where(keep, s, _MASK_VALUE)
            m_prev = m_ref[:, h:h + 1]
            m_new = jnp.maximum(m_prev, jnp.max(s, axis=-1, keepdims=True))
            alpha = jnp.exp(m_prev - m_new)
            p = jnp.exp(s - m_new)
            l_ref[:, h:h + 1] = alpha * l_ref[:, h:h + 1] + jnp.sum(
                p, axis=-1, keepdims=True)
            pv = jnp.dot(p.astype(jnp.bfloat16),
                         v_ref[:, c0:c1].astype(jnp.bfloat16),
                         preferred_element_type=jnp.float32)
            acc_ref[:, c0:c1] = alpha * acc_ref[:, c0:c1] + pv
            m_ref[:, h:h + 1] = m_new

    # Fully-visible block (entirely below the diagonal): skip the mask math.
    @pl.when(k_hi <= q_lo)
    def _():
        _online_softmax_update(apply_mask=False)

    # Diagonal-straddling block: apply the causal mask.
    @pl.when((k_lo <= q_hi) & (k_hi > q_lo))
    def _():
        _online_softmax_update(apply_mask=True)

    # Fully-masked blocks (k_lo > q_hi): no compute; the kv index_map clamp
    # also suppresses their DMA.

    @pl.when(ki == pl.num_programs(2) - 1)
    def _():
        for h in range(num_heads):
            c0 = h * head_dim
            c1 = c0 + head_dim
            # Exact division (per review: approx reciprocal only loosened accuracy
            # and this runs once per q block on a (tq,1) vector).
            o_ref[:, c0:c1] = (acc_ref[:, c0:c1] / l_ref[:, h:h + 1]
                               ).astype(o_ref.dtype)


def flash_causal_attention_fused(qkv, out_dtype, *, batch, seq_len, embed_dim,
                                 num_heads, head_dim, block_q=256, block_kv=128):
    """qkv: (B*S, 3E) with columns [q|k|v] -> causal attention output (B*S, E)."""
    B, S, E = batch, seq_len, embed_dim
    scale = 1.0 / math.sqrt(head_dim)
    # HBM arrays are f32 here, so sublane alignment is 8 (would be 16 for bf16
    # HBM blocks).  tkv is the lane dim of the s/p tile: prefer 128 where S allows.
    tq = _tile(S, block_q, 8)
    tkv = _tile(S, block_kv, 8)
    n_q = S // tq
    n_kv = S // tkv

    kern = functools.partial(_flash_attn_kernel, scale=scale, block_q=tq,
                             block_kv=tkv, num_heads=num_heads, head_dim=head_dim)

    def q_map(b, qi, ki):
        return (b * n_q + qi, 0)

    def o_map(b, qi, ki):
        return (b * n_q + qi, 0)

    def kv_map(col_block):
        def imap(b, qi, ki):
            # Clamp to the last kv block needed for this q block: fully-masked
            # steps repeat the previous block index, so Pallas elides their DMA.
            last_needed = (qi * tq + tq - 1) // tkv
            return (b * n_kv + jnp.minimum(ki, last_needed), col_block)
        return imap

    return pl.pallas_call(
        kern,
        out_shape=jax.ShapeDtypeStruct((B * S, E), out_dtype),
        grid_spec=pltpu.PrefetchScalarGridSpec(
            num_scalar_prefetch=0,
            grid=(B, n_q, n_kv),
            in_specs=[
                pl.BlockSpec((tq, E), q_map),       # q columns  [0, E)
                pl.BlockSpec((tkv, E), kv_map(1)),  # k columns  [E, 2E)
                pl.BlockSpec((tkv, E), kv_map(2)),  # v columns  [2E, 3E)
            ],
            out_specs=pl.BlockSpec((tq, E), o_map),
            scratch_shapes=[
                pltpu.VMEM((tq, num_heads), jnp.float32),   # running max  m (per head)
                pltpu.VMEM((tq, num_heads), jnp.float32),   # running denom l (per head)
                pltpu.VMEM((tq, E), jnp.float32),           # running numerator acc
            ],
        ),
        compiler_params=pltpu.CompilerParams(
            dimension_semantics=("parallel", "parallel", "arbitrary")),
    )(qkv, qkv, qkv)


# ----------------------------------------------------------------------------
# Full module forward.
# ----------------------------------------------------------------------------
def attention_forward(hidden_states, params, num_heads, head_dim,
                      *, block_q=256, block_kv=128, bm=256, bn=256, bk=512):
    """hidden_states: (B, S, E) -> (B, S, E)."""
    B, S, E = hidden_states.shape
    x2d = hidden_states.reshape(B * S, E)

    # Fused QKV projection: single tiled matmul, x streamed from HBM once.
    qkv = linear(x2d, params["qkv_w_t"], params["qkv_b"], bm=bm, bn=bn, bk=bk)

    # No head split/merge transposes: attention reads the flat (B*S, 3E) qkv
    # directly and writes a lane-dense (B*S, E) output.
    attn = flash_causal_attention_fused(
        qkv, x2d.dtype, batch=B, seq_len=S, embed_dim=E,
        num_heads=num_heads, head_dim=head_dim,
        block_q=block_q, block_kv=block_kv)

    out = linear(attn, params["o_w_t"], params["o_b"], bm=bm, bn=bn, bk=bk)
    return out.reshape(B, S, E)


def init_params(key, embed_dim):
    ks = jax.random.split(key, 4)
    std = 0.02
    return {
        # Wq|Wk|Wv concatenated, stored pre-transposed: (E, 3E)
        "qkv_w_t": jax.random.normal(ks[0], (embed_dim, 3 * embed_dim), jnp.float32) * std,
        "qkv_b": jax.random.normal(ks[1], (3 * embed_dim,), jnp.float32) * std,
        "o_w_t": jax.random.normal(ks[2], (embed_dim, embed_dim), jnp.float32) * std,
        "o_b": jax.random.normal(ks[3], (embed_dim,), jnp.float32) * std,
    }


def reference_forward(hidden_states, params, num_heads, head_dim):
    """Pure-JAX reference (mirrors the kernel's bf16 MXU operands, f32 accumulation)."""
    B, S, E = hidden_states.shape
    bf = lambda t: t.astype(jnp.bfloat16)
    x = hidden_states.reshape(B * S, E)
    qkv = jnp.dot(bf(x), bf(params["qkv_w_t"]),
                  preferred_element_type=jnp.float32) + params["qkv_b"]
    q, k, v = qkv[:, :E], qkv[:, E:2 * E], qkv[:, 2 * E:]

    def sh(t):
        return t.reshape(B, S, num_heads, head_dim).transpose(0, 2, 1, 3)

    q, k, v = sh(q), sh(k), sh(v)
    s = jnp.einsum("bhqd,bhkd->bhqk", bf(q), bf(k),
                   preferred_element_type=jnp.float32) / math.sqrt(head_dim)
    causal = jnp.tril(jnp.ones((S, S), bool))
    s = jnp.where(causal[None, None], s, _MASK_VALUE)
    p = jax.nn.softmax(s, axis=-1)
    o = jnp.einsum("bhqk,bhkd->bhqd", bf(p), bf(v),
                   preferred_element_type=jnp.float32)
    o = o.transpose(0, 2, 1, 3).reshape(B * S, E)
    o = jnp.dot(bf(o), bf(params["o_w_t"]),
                preferred_element_type=jnp.float32) + params["o_b"]
    return o.reshape(B, S, E)


if __name__ == "__main__":
    # Small config: batch=2, seq=32, hidden=256, heads=4, head_dim=64.
    # E=256 keeps the attention blocks 128-lane aligned; small attention blocks
    # (16) are passed so the multi-block flash path (online-softmax accumulation,
    # causal block skipping, kv DMA-clamping, masked vs unmasked branches) and
    # the tiled linear grid (including the K-reduction loop) are all exercised.
    B, S, E, H = 2, 32, 256, 4
    D = E // H

    key = jax.random.PRNGKey(0)
    k_param, k_x = jax.random.split(key)
    params = init_params(k_param, E)
    hidden_states = jax.random.normal(k_x, (B, S, E), jnp.float32)

    out = attention_forward(hidden_states, params, H, D,
                            block_q=16, block_kv=16, bm=32, bn=128, bk=128)
    out = jax.block_until_ready(out)

    ref = reference_forward(hidden_states, params, H, D)
    assert out.shape == (B, S, E)
    max_err = float(jnp.max(jnp.abs(out - ref)))
    # Tolerance covers bf16-operand rounding-point differences between the
    # flash recombination and the direct-softmax reference.
    assert jnp.allclose(out, ref, atol=5e-3, rtol=5e-3), \
        f"mismatch vs reference (max abs err {max_err})"

    print("KERNEL_OK")
</pallas_src>

<mosaic_0001>
module attributes {stable_mosaic.version = 11 : i64} {
  func.func @_matmul_bias_kernel(%arg0: i32, %arg1: i32, %arg2: i32, %arg3: memref<32x128xf32, #tpu.memory_space<vmem>>, %arg4: memref<128x128xf32, #tpu.memory_space<vmem>>, %arg5: memref<1x128xf32, #tpu.memory_space<vmem>>, %arg6: memref<32x128xf32, #tpu.memory_space<vmem>>, %arg7: memref<32x128xf32, #tpu.memory_space<vmem>>) attributes {dimension_semantics = [#tpu.dimension_semantics<parallel>, #tpu.dimension_semantics<parallel>, #tpu.dimension_semantics<arbitrary>], iteration_bounds = array<i64: 2, 6, 2>, scalar_prefetch = 0 : i64, scratch_operands = 1 : i64, tpu.core_type = #tpu.core_type<tc>, window_params = [{transform_indices = @transform_0, window_bounds = array<i64: 32, 128>}, {transform_indices = @transform_1, window_bounds = array<i64: 128, 128>}, {transform_indices = @transform_2, window_bounds = array<i64: 1, 128>}, {transform_indices = @transform_3, window_bounds = array<i64: 32, 128>}]} {
    %c0_i32 = arith.constant 0 : i32
    %0 = arith.cmpi eq, %arg2, %c0_i32 : i32
    %1 = arith.extui %0 : i1 to i32
    %c0_i32_0 = arith.constant 0 : i32
    %2 = arith.cmpi ne, %1, %c0_i32_0 : i32
    scf.if %2 {
      %cst_9 = arith.constant 0.000000e+00 : f32
      %14 = vector.broadcast %cst_9 : f32 to vector<32x128xf32>
      %c0_10 = arith.constant 0 : index
      %c0_11 = arith.constant 0 : index
      %15 = vector.load %arg7[%c0_10, %c0_11] : memref<32x128xf32, #tpu.memory_space<vmem>>, vector<32x128xf32>
      tpu.vector_store %arg7[%c0_10, %c0_11], %14 {strides = array<i32>} : memref<32x128xf32, #tpu.memory_space<vmem>>, vector<32x128xf32>,
    } else {
    }
    %c0 = arith.constant 0 : index
    %c0_1 = arith.constant 0 : index
    %3 = vector.load %arg7[%c0, %c0_1] : memref<32x128xf32, #tpu.memory_space<vmem>>, vector<32x128xf32>
    %c0_2 = arith.constant 0 : index
    %c0_3 = arith.constant 0 : index
    %4 = vector.load %arg3[%c0_2, %c0_3] : memref<32x128xf32, #tpu.memory_space<vmem>>, vector<32x128xf32>
    %5 = arith.truncf %4 : vector<32x128xf32> to vector<32x128xbf16>
    %c0_4 = arith.constant 0 : index
    %c0_5 = arith.constant 0 : index
    %6 = vector.load %arg4[%c0_4, %c0_5] : memref<128x128xf32, #tpu.memory_space<vmem>>, vector<128x128xf32>
    %7 = arith.truncf %6 : vector<128x128xf32> to vector<128x128xbf16>
    %cst = arith.constant dense<0.000000e+00> : vector<32x128xf32>
    %8 = tpu.matmul %5, %7, %cst {dimension_numbers = #tpu.dot_dimension_numbers<[1], [0], [0], [1], [0, 0, 1, 1], [], []>} : vector<32x128xbf16>, vector<128x128xbf16>, vector<32x128xf32> -> vector<32x128xf32>
    %9 = arith.addf %3, %8 : vector<32x128xf32>
    %c0_6 = arith.constant 0 : index
    %c0_7 = arith.constant 0 : index
    %10 = vector.load %arg7[%c0_6, %c0_7] : memref<32x128xf32, #tpu.memory_space<vmem>>, vector<32x128xf32>
    tpu.vector_store %arg7[%c0_6, %c0_7], %9 {strides = array<i32>} : memref<32x128xf32, #tpu.memory_space<vmem>>, vector<32x128xf32>,
    %c1_i32 = arith.constant 1 : i32
    %11 = arith.cmpi eq, %arg2, %c1_i32 : i32
    %12 = arith.extui %11 : i1 to i32
    %c0_i32_8 = arith.constant 0 : i32
    %13 = arith.cmpi ne, %12, %c0_i32_8 : i32
    scf.if %13 {
      %c0_9 = arith.constant 0 : index
      %c0_10 = arith.constant 0 : index
      %14 = vector.load %arg7[%c0_9, %c0_10] : memref<32x128xf32, #tpu.memory_space<vmem>>, vector<32x128xf32>
      %c0_11 = arith.constant 0 : index
      %c0_12 = arith.constant 0 : index
      %15 = vector.load %arg5[%c0_11, %c0_12] : memref<1x128xf32, #tpu.memory_space<vmem>>, vector<1x128xf32>
      %16 = vector.broadcast %15 : vector<1x128xf32> to vector<32x128xf32>
      %17 = arith.addf %14, %16 : vector<32x128xf32>
      %c0_13 = arith.constant 0 : index
      %c0_14 = arith.constant 0 : index
      %18 = vector.load %arg6[%c0_13, %c0_14] : memref<32x128xf32, #tpu.memory_space<vmem>>, vector<32x128xf32>
      tpu.vector_store %arg6[%c0_13, %c0_14], %17 {strides = array<i32>} : memref<32x128xf32, #tpu.memory_space<vmem>>, vector<32x128xf32>,
    } else {
    }
    return
  }
  func.func @transform_0(%arg0: i32, %arg1: i32, %arg2: i32) -> (i32, i32) {
    %c0_i32 = arith.constant 0 : i32
    return %arg0, %arg2 : i32, i32
  }
  func.func @transform_1(%arg0: i32, %arg1: i32, %arg2: i32) -> (i32, i32) {
    %c0_i32 = arith.constant 0 : i32
    return %arg2, %arg1 : i32, i32
  }
  func.func @transform_2(%arg0: i32, %arg1: i32, %arg2: i32) -> (i32, i32) {
    %c0_i32 = arith.constant 0 : i32
    %c0_i32_0 = arith.constant 0 : i32
    return %c0_i32, %arg1 : i32, i32
  }
  func.func @transform_3(%arg0: i32, %arg1: i32, %arg2: i32) -> (i32, i32) {
    %c0_i32 = arith.constant 0 : i32
    return %arg0, %arg1 : i32, i32
  }
}

</mosaic_0001>

<llo_original>
// kernel: tpu_custom_call.1
$region0: #{tpu_custom_call.1}
  #allocation0 [shape = 'u32[]', space=smem, size = 0x4, offset = 0x4, fixed_abs, tag = 'smem constant byte address 0x4 - core index']
  #allocation1 [shape = 'u32[144,128]{1,0:T(1,128)}', space=vmem, size = 0x12000, scoped, tag = 'internal scratch']
  #allocation2 [shape = 'f32[32,128]{1,0:T(8,128)}', space=vmem, size = 0x4000, scoped, tag = 'scratch operand']
  %s0 = inlined_call_operand.hbm [shape: f32[64,256], index: 0, kind: input, shape index: {}]
  %s1 = inlined_call_operand.hbm [shape: f32[256,768], index: 1, kind: input, shape index: {}]
  %s2 = inlined_call_operand.vmem [shape: f32[1,768], index: 2, kind: input, shape index: {}]
  %s3 = inlined_call_operand.hbm [shape: f32[64,768], index: 3, kind: output, shape index: {}]
  %s4 = sld [smem:[#allocation0]]
  $region61: #{tpu_custom_call.1} parent=0
    _
  %s6 = ssub.s32 1, %s4
  %s7 = scalar_select 0, %s6, %s4
  $region1: #{tpu_custom_call.1} parent=0
    #allocation3 [shape = 'u8[32768]{0}', space=vmem, size = 0x8000, scoped, tag = 'input window, operand 0']
    #allocation4 [shape = 's32[2]{0}', space=sflag, size = 0x8, scoped, tag = 'scoped memory for tpu_custom_call.1']
    #allocation5 [shape = 's32[2]{0}', space=sflag, size = 0x8, scoped, tag = 'scoped memory for tpu_custom_call.1']
    #allocation6 [shape = 'u8[131072]{0}', space=vmem, size = 0x20000, scoped, tag = 'input window, operand 1']
    #allocation7 [shape = 's32[2]{0}', space=sflag, size = 0x8, scoped, tag = 'scoped memory for tpu_custom_call.1']
    #allocation8 [shape = 'u8[32768]{0}', space=vmem, size = 0x8000, scoped, tag = 'output window, operand 0']
    %8 = vsyncpa [#allocation4], 0
    %s9 = scalar_lea.sflag [#allocation4], 1
    %10 = vsyncpa %s9, 0
    %11 = vsyncpa [#allocation7], 0
    %s12 = scalar_lea.sflag [#allocation7], 1
    %13 = vsyncpa %s12, 0
    %14 = vsyncpa [#allocation5], 0
    %s15 = scalar_lea.sflag [#allocation5], 1
    %16 = vsyncpa %s15, 0
    loop: start=0, step=1, limit=26
    $region2: #{tpu_custom_call.1} parent=1 // loop_pre_header
      _
    $region3: #{tpu_custom_call.1} parent=1 // loop_header
      %s18 = sphi 0, %s22
      %p19 = scmp.ge.s32.totalorder %s18, 26
      %s25 = sphi 0, %s44
      %s26 = sphi 0, %s40
      %s27 = sphi 0, %s36
      %s28 = sphi 0, %s25
      %s29 = sphi 0, %s26
      %s30 = sphi 0, %s27
      %s31 = sphi 0, %s28
      %s32 = sphi 0, %s29
      %s33 = sphi 0, %s30
      %s49 = sphi 0, %s51
      %s52 = sphi 0, %s49
      %s53 = sphi 0, %s52
      %s69 = sphi 0, %s53
      %s77 = sphi 0, %s79
      %s80 = sphi 0, %s77
      %s81 = sphi 0, %s80
      %s97 = sphi 0, %s81
      %s103 = sphi 0, %s105
      %s106 = sphi 0, %s103
      %s107 = sphi 0, %s106
      %s123 = sphi 0, %s107
      %s131 = sphi 0, %s133
      %s134 = sphi 0, %s131
      %s135 = sphi 0, %s134
      %s151 = sphi 0, %s135
    $region4: #{tpu_custom_call.1} parent=1 // loop_header_branch
      %21 = sbr.rel (%p19) target = $region8
    $region5: #{tpu_custom_call.1} parent=1 // loop_body
      %s23 = ssub.s32 %s18, 1
      %s24 = ssub.s32 %s18, 2
      %s34 = sadd.s32 1, %s27
      %p35 = scmp.ge.s32.totalorder %s34, 2
      %s36 = scalar_select %p35, 0, %s34
      %s37 = sadd.s32 1, %s26
      %s38 = scalar_select %p35, %s37, %s26
      %p39 = scmp.ge.s32.totalorder %s38, 6
      %s40 = scalar_select %p39, 0, %s38
      %s41 = sadd.s32 1, %s25
      %s42 = scalar_select %p39, %s41, %s25
      %p43 = scmp.ge.s32.totalorder %s42, 2
      %s44 = scalar_select %p43, 0, %s42
      %s45 = ssub.s32 %s25, %s44
      %s46 = ssub.s32 %s27, %s36
      %s47 = sor.u32 %s45, %s46
      %p48 = scmp.eq.s32.totalorder %s47, 0
      %s50 = sadd.s32 %s49, 1
      %s51 = scalar_select %p48, %s49, %s50
      %p54 = pneg %p48
      %p55 = scmp.eq.s32.totalorder %s18, 23
      %p56 = por %p54, %p55
      %p57 = scmp.ne.s32.totalorder %s49, %s52
      %p58 = scmp.eq.s32.totalorder %s18, 0
      %p59 = por %p57, %p58
      %p60 = scmp.ne.s32.totalorder %s49, %s52
      %p61 = scmp.eq.s32.totalorder %s23, 23
      %p62 = por %p60, %p61
      %p63 = scmp.ne.s32.totalorder %s52, %s53
      %p64 = scmp.eq.s32.totalorder %s23, 0
      %p65 = por %p63, %p64
      %p66 = scmp.ne.s32.totalorder %s52, %s53
      %p67 = scmp.eq.s32.totalorder %s24, 23
      %p68 = por %p66, %p67
      %p70 = scmp.ne.s32.totalorder %s53, %s69
      %p71 = scmp.eq.s32.totalorder %s24, 0
      %p72 = por %p70, %p71
      %s73 = ssub.s32 %s27, %s36
      %s74 = ssub.s32 %s26, %s40
      %s75 = sor.u32 %s73, %s74
      %p76 = scmp.eq.s32.totalorder %s75, 0
      %s78 = sadd.s32 %s77, 1
      %s79 = scalar_select %p76, %s77, %s78
      %p82 = pneg %p76
      %p83 = scmp.eq.s32.totalorder %s18, 23
      %p84 = por %p82, %p83
      %p85 = scmp.ne.s32.totalorder %s77, %s80
      %p86 = scmp.eq.s32.totalorder %s18, 0
      %p87 = por %p85, %p86
      %p88 = scmp.ne.s32.totalorder %s77, %s80
      %p89 = scmp.eq.s32.totalorder %s23, 23
      %p90 = por %p88, %p89
      %p91 = scmp.ne.s32.totalorder %s80, %s81
      %p92 = scmp.eq.s32.totalorder %s23, 0
      %p93 = por %p91, %p92
      %p94 = scmp.ne.s32.totalorder %s80, %s81
      %p95 = scmp.eq.s32.totalorder %s24, 23
      %p96 = por %p94, %p95
      %p98 = scmp.ne.s32.totalorder %s81, %s97
      %p99 = scmp.eq.s32.totalorder %s24, 0
      %p100 = por %p98, %p99
      %s101 = ssub.s32 %s26, %s40
      %p102 = scmp.eq.s32.totalorder %s101, 0
      %s104 = sadd.s32 %s103, 1
      %s105 = scalar_select %p102, %s103, %s104
      %p108 = pneg %p102
      %p109 = scmp.eq.s32.totalorder %s18, 23
      %p110 = por %p108, %p109
      %p111 = scmp.ne.s32.totalorder %s103, %s106
      %p112 = scmp.eq.s32.totalorder %s18, 0
      %p113 = por %p111, %p112
      %p114 = scmp.ne.s32.totalorder %s103, %s106
      %p115 = scmp.eq.s32.totalorder %s23, 23
      %p116 = por %p114, %p115
      %p117 = scmp.ne.s32.totalorder %s106, %s107
      %p118 = scmp.eq.s32.totalorder %s23, 0
      %p119 = por %p117, %p118
      %p120 = scmp.ne.s32.totalorder %s106, %s107
      %p121 = scmp.eq.s32.totalorder %s24, 23
      %p122 = por %p120, %p121
      %p124 = scmp.ne.s32.totalorder %s107, %s123
      %p125 = scmp.eq.s32.totalorder %s24, 0
      %p126 = por %p124, %p125
      %s127 = ssub.s32 %s25, %s44
      %s128 = ssub.s32 %s26, %s40
      %s129 = sor.u32 %s127, %s128
      %p130 = scmp.eq.s32.totalorder %s129, 0
      %s132 = sadd.s32 %s131, 1
      %s133 = scalar_select %p130, %s131, %s132
      %p136 = pneg %p130
      %p137 = scmp.eq.s32.totalorder %s18, 23
      %p138 = por %p136, %p137
      %p139 = scmp.ne.s32.totalorder %s131, %s134
      %p140 = scmp.eq.s32.totalorder %s18, 0
      %p141 = por %p139, %p140
      %p142 = scmp.ne.s32.totalorder %s131, %s134
      %p143 = scmp.eq.s32.totalorder %s23, 23
      %p144 = por %p142, %p143
      %p145 = scmp.ne.s32.totalorder %s134, %s135
      %p146 = scmp.eq.s32.totalorder %s23, 0
      %p147 = por %p145, %p146
      %p148 = scmp.ne.s32.totalorder %s134, %s135
      %p149 = scmp.eq.s32.totalorder %s24, 23
      %p150 = por %p148, %p149
      %p152 = scmp.ne.s32.totalorder %s135, %s151
      %p153 = scmp.eq.s32.totalorder %s24, 0
      %p154 = por %p152, %p153
      %p155 = scmp.le.s32.totalorder 1, %s18
      %p156 = scmp.lt.s32.totalorder %s18, 25
      %p157 = pnand %p155, %p156
      %p158 = pneg %p157
      // Predicated region
      $region9: #{tpu_custom_call.1} parent=5 // pred_check
        _
      $region10: #{tpu_custom_call.1} parent=5 // pred_check_branch
        %160 = sbr.rel (%p157) target = $region12
      $region11: #{tpu_custom_call.1} parent=5 // pred_region
        %s161 = ssub.s32 %s18, 1
      $region12: #{tpu_custom_call.1} parent=5 // pred_fallthru
        _
      %p162 = scmp.lt.s32.totalorder %s18, 24
      // Predicated region
      $region13: #{tpu_custom_call.1} parent=5 // pred_check
        %p163 = pneg %p162
      $region14: #{tpu_custom_call.1} parent=5 // pred_check_branch
        %165 = sbr.rel (%p163) target = $region16
      $region15: #{tpu_custom_call.1} parent=5 // pred_region
        // Predicated region
        $region17: #{tpu_custom_call.1} parent=15 // pred_check
          %p166 = pneg %p59
        $region18: #{tpu_custom_call.1} parent=15 // pred_check_branch
          %168 = sbr.rel (%p166) target = $region20
        $region19: #{tpu_custom_call.1} parent=15 // pred_region
          %s169 = sand.u32 %s49, 1
          %s170 = scalar_lea.sflag [#allocation4], %s169
          %s171 = sand.u32 %s49, 1
          %s172 = smul.addr %s171, 32
          %s173 = scalar_lea.vmem [#allocation3], %s172
          %s174 = smul.u32 4, %s25
          %s176 = ssub.s32 512, 512
          %177 = vsyncadd %s170, %s176
          %s178 = smul.addr %s174, 2
          %s179 = sadd.s32 %s27, %s178
          %s180 = smul.addr %s179, 128
          %s181 = scalar_lea.hbm %s0, %s180
          %s182 = sshll.u32 %s173, 4
          %s183 = int_to_ptr.vmem [resolvable:$true] %s182
          %188 = dma.hbm_to_vmem [thread:$0]  %s181, 512, %s183, %s170, 256, 128, 8
        $region20: #{tpu_custom_call.1} parent=15 // pred_fallthru
          _
        // Predicated region
        $region21: #{tpu_custom_call.1} parent=15 // pred_check
          %p189 = pneg %p87
        $region22: #{tpu_custom_call.1} parent=15 // pred_check_branch
          %191 = sbr.rel (%p189) target = $region24
        $region23: #{tpu_custom_call.1} parent=15 // pred_region
          %s192 = sand.u32 %s77, 1
          %s193 = scalar_lea.sflag [#allocation7], %s192
          %s194 = sand.u32 %s77, 1
          %s195 = smul.addr %s194, 128
          %s196 = scalar_lea.vmem [#allocation6], %s195
          %s197 = smul.u32 16, %s27
          %s199 = ssub.s32 2048, 2048
          %200 = vsyncadd %s193, %s199
          %s201 = smul.addr %s197, 6
          %s202 = sadd.s32 %s26, %s201
          %s203 = smul.addr %s202, 128
          %s204 = scalar_lea.hbm %s1, %s203
          %s205 = sshll.u32 %s196, 4
          %s206 = int_to_ptr.vmem [resolvable:$true] %s205
          %211 = dma.hbm_to_vmem [thread:$0]  %s204, 2048, %s206, %s193, 768, 128, 8
        $region24: #{tpu_custom_call.1} parent=15 // pred_fallthru
          _
        // Predicated region
        $region25: #{tpu_custom_call.1} parent=15 // pred_check
          %p212 = pneg %p113
        $region26: #{tpu_custom_call.1} parent=15 // pred_check_branch
          %214 = sbr.rel (%p212) target = $region28
        $region27: #{tpu_custom_call.1} parent=15 // pred_region
          %p215 = scmp.lt.s32.totalorder %s26, 5
          %s216 = scalar_select %p215, %s26, 5
          %s217 = scalar_lea.vmem %s2, %s216
        $region28: #{tpu_custom_call.1} parent=15 // pred_fallthru
          _
      $region16: #{tpu_custom_call.1} parent=5 // pred_fallthru
        _
      %p218 = scmp.le.s32.totalorder 1, %s18
      %p219 = scmp.lt.s32.totalorder %s18, 25
      %p220 = pnand %p218, %p219
      %p221 = pneg %p220
      // Predicated region
      $region29: #{tpu_custom_call.1} parent=5 // pred_check
        _
      $region30: #{tpu_custom_call.1} parent=5 // pred_check_branch
        %223 = sbr.rel (%p220) target = $region32
      $region31: #{tpu_custom_call.1} parent=5 // pred_region
        %s224 = ssub.s32 %s18, 1
        %s225 = sand.u32 %s52, 1
        %s226 = scalar_lea.sflag [#allocation4], %s225
        %s227 = sand.u32 %s52, 1
        %s228 = smul.addr %s227, 32
        %s229 = scalar_lea.vmem [#allocation3], %s228
        // Predicated region
        $region33: #{tpu_custom_call.1} parent=31 // pred_check
          %p230 = pneg %p65
        $region34: #{tpu_custom_call.1} parent=31 // pred_check_branch
          %232 = sbr.rel (%p230) target = $region36
        $region35: #{tpu_custom_call.1} parent=31 // pred_region
          %233 = dma.done %s226, 512
        $region36: #{tpu_custom_call.1} parent=31 // pred_fallthru
          _
        %s234 = sand.u32 %s80, 1
        %s235 = scalar_lea.sflag [#allocation7], %s234
        %s236 = sand.u32 %s80, 1
        %s237 = smul.addr %s236, 128
        %s238 = scalar_lea.vmem [#allocation6], %s237
        // Predicated region
        $region37: #{tpu_custom_call.1} parent=31 // pred_check
          %p239 = pneg %p93
        $region38: #{tpu_custom_call.1} parent=31 // pred_check_branch
          %241 = sbr.rel (%p239) target = $region40
        $region39: #{tpu_custom_call.1} parent=31 // pred_region
          %242 = dma.done %s235, 2048
        $region40: #{tpu_custom_call.1} parent=31 // pred_fallthru
          _
        %s243 = sand.u32 %s52, 1
        %s244 = scalar_lea.sflag [#allocation4], %s243
        %s245 = sand.u32 %s52, 1
        %s246 = smul.addr %s245, 32
        %s247 = scalar_lea.vmem [#allocation3], %s246
        %p248 = pneg %p65
        %p249 = pneg %p62
        %s250 = sand.u32 %s80, 1
        %s251 = scalar_lea.sflag [#allocation7], %s250
        %s252 = sand.u32 %s80, 1
        %s253 = smul.addr %s252, 128
        %s254 = scalar_lea.vmem [#allocation6], %s253
        %p255 = pneg %p93
        %p256 = pneg %p90
        %p257 = scmp.lt.s32.totalorder %s29, 5
        %s258 = scalar_select %p257, %s29, 5
        %s259 = scalar_lea.vmem %s2, %s258
        %p260 = pneg %p119
        %p261 = pneg %p116
        %p262 = pneg %p147
        %p263 = pneg %p144
        %s264 = sand.u32 %s134, 1
        %s265 = scalar_lea.sflag [#allocation5], %s264
        %s266 = sand.u32 %s134, 1
        %s267 = smul.addr %s266, 32
        %s268 = scalar_lea.vmem [#allocation8], %s267
        %s269 = smul.u32 4, %s28
        %s270 = smul.u32 16, %s30
        %p271 = scmp.lt.s32.totalorder %s29, 5
        %s272 = scalar_select %p271, %s29, 5
        %s273 = scalar_lea.vmem %s2, %s272
        %s274 = smul.u32 4, %s28
        %p276 = scmp.eq.s32.totalorder %s30, 0
        // Predicated region
        $region41: #{tpu_custom_call.1} parent=31 // pred_check
          %p277 = pneg %p276
        $region42: #{tpu_custom_call.1} parent=31 // pred_check_branch
          %279 = sbr.rel (%p277) target = $region44
        $region43: #{tpu_custom_call.1} parent=31 // pred_region
          %280 = vst [vmem:[#allocation2] sm:$0xff] 0.0
          %281 = vst [vmem:[#allocation2 + $0x8] sm:$0xff] 0.0
          %282 = vst [vmem:[#allocation2 + $0x10] sm:$0xff] 0.0
          %283 = vst [vmem:[#allocation2 + $0x18] sm:$0xff] 0.0
        $region44: #{tpu_custom_call.1} parent=31 // pred_fallthru
          _
        %v284 = vld [vmem:[#allocation2] sm:$0xff]
        %v285 = vld [vmem:[#allocation2 + $0x8] sm:$0xff]
        %v286 = vld [vmem:[#allocation2 + $0x10] sm:$0xff]
        %v287 = vld [vmem:[#allocation2 + $0x18] sm:$0xff]
        %v288 = vld [vmem:[%s229] sm:$0xff]
        %v289 = vld [vmem:[%s229 + $0x8] sm:$0xff]
        %v290 = vld [vmem:[%s229 + $0x10] sm:$0xff]
        %v291 = vld [vmem:[%s229 + $0x18] sm:$0xff]
        %v292 = vpack.c.bf16 %v289, %v288
        %v293 = vpack.c.bf16 %v291, %v290
        %v294 = vld [vmem:[%s238] sm:$0xff]
        %v295 = vld [vmem:[%s238 + $0x8] sm:$0xff]
        %v296 = vld [vmem:[%s238 + $0x10] sm:$0xff]
        %v297 = vld [vmem:[%s238 + $0x18] sm:$0xff]
        %v298 = vld [vmem:[%s238 + $0x20] sm:$0xff]
        %v299 = vld [vmem:[%s238 + $0x28] sm:$0xff]
        %v300 = vld [vmem:[%s238 + $0x30] sm:$0xff]
        %v301 = vld [vmem:[%s238 + $0x38] sm:$0xff]
        %v302 = vld [vmem:[%s238 + $0x40] sm:$0xff]
        %v303 = vld [vmem:[%s238 + $0x48] sm:$0xff]
        %v304 = vld [vmem:[%s238 + $0x50] sm:$0xff]
        %v305 = vld [vmem:[%s238 + $0x58] sm:$0xff]
        %v306 = vld [vmem:[%s238 + $0x60] sm:$0xff]
        %v307 = vld [vmem:[%s238 + $0x68] sm:$0xff]
        %v308 = vld [vmem:[%s238 + $0x70] sm:$0xff]
        %v309 = vld [vmem:[%s238 + $0x78] sm:$0xff]
        %v310 = vpack.c.bf16 %v295, %v294
        %v311 = vpack.c.bf16 %v297, %v296
        %v312 = vpack.c.bf16 %v299, %v298
        %v313 = vpack.c.bf16 %v301, %v300
        %v314 = vpack.c.bf16 %v303, %v302
        %v315 = vpack.c.bf16 %v305, %v304
        %v316 = vpack.c.bf16 %v307, %v306
        %v317 = vpack.c.bf16 %v309, %v308
        %318 = vmatprep.subr.bf16.mxu0 0
        %319 = vmatpush1.bf16.msra.mxu0 %v310
        %320 = vmatprep.subr.bf16.mxu0 0
        %321 = vmatpush1.bf16.msra.mxu0 %v311
        %322 = vmatprep.subr.bf16.mxu0 0
        %323 = vmatpush1.bf16.msra.mxu0 %v312
        %324 = vmatprep.subr.bf16.mxu0 0
        %325 = vmatpush1.bf16.msra.mxu0 %v313
        %326 = vmatprep.subr.bf16.mxu0 0
        %327 = vmatpush1.bf16.msra.mxu0 %v314
        %328 = vmatprep.subr.bf16.mxu0 0
        %329 = vmatpush1.bf16.msra.mxu0 %v315
        %330 = vmatprep.subr.bf16.mxu0 0
        %331 = vmatpush1.bf16.msra.mxu0 %v316
        %332 = vmatprep.subr.bf16.mxu0 0
        %333 = vmatpush1.bf16.msra.mxu0 %v317
        %334 = vmatprep.subr.bf16.mxu0 0
        %335 = vmatpush1.bf16.msra.mxu0 0
        %336 = vmatprep.subr.bf16.mxu0 0
        %337 = vmatpush1.bf16.msra.mxu0 0
        %338 = vmatprep.subr.bf16.mxu0 0
        %339 = vmatpush1.bf16.msra.mxu0 0
        %340 = vmatprep.subr.bf16.mxu0 0
        %341 = vmatpush1.bf16.msra.mxu0 0
        %342 = vmatprep.subr.bf16.mxu0 0
        %343 = vmatpush1.bf16.msra.mxu0 0
        %344 = vmatprep.subr.bf16.mxu0 0
        %345 = vmatpush1.bf16.msra.mxu0 0
        %346 = vmatprep.subr.bf16.mxu0 0
        %347 = vmatpush1.bf16.msra.mxu0 0
        %348 = vmatprep.subr.bf16.mxu0 0
        %349 = vmatpush1.bf16.msra.mxu0 0
        %350 = vmatprep.mubr.bf16.mxu0 0
        %351 = vmatmul.mubr.bf16.gmra.mrb[0].mxu0 %v292
        %v352 = vpop.f32.mrb[0].mxu0
        %v353 = vadd.f32 0.0, %v352
        %v354 = vpop.f32.mrb[0].mxu0
        %v355 = vpop.f32.mrb[0].mxu0
        %v356 = vadd.f32 0.0, %v355
        %v357 = vpop.f32.mrb[0].mxu0
        %358 = vmatprep.mubr.bf16.mxu0 0
        %359 = vmatmul.mubr.bf16.gmra.mrb[0].mxu0 %v293
        %v360 = vpop.f32.mrb[0].mxu0
        %v361 = vadd.f32 0.0, %v360
        %v362 = vpop.f32.mrb[0].mxu0
        %v363 = vpop.f32.mrb[0].mxu0
        %v364 = vadd.f32 0.0, %v363
        %v365 = vpop.f32.mrb[0].mxu0
        %366 = vdwg.mxu0
        %v367 = vadd.f32 %v284, %v353
        %v368 = vadd.f32 %v285, %v356
        %v369 = vadd.f32 %v286, %v361
        %v370 = vadd.f32 %v287, %v364
        %371 = vst [vmem:[#allocation2] sm:$0xff] %v367
        %372 = vst [vmem:[#allocation2 + $0x8] sm:$0xff] %v368
        %373 = vst [vmem:[#allocation2 + $0x10] sm:$0xff] %v369
        %374 = vst [vmem:[#allocation2 + $0x18] sm:$0xff] %v370
        %p375 = scmp.eq.s32.totalorder %s30, 1
        // Predicated region
        $region45: #{tpu_custom_call.1} parent=31 // pred_check
          %p376 = pneg %p375
        $region46: #{tpu_custom_call.1} parent=31 // pred_check_branch
          %378 = sbr.rel (%p376) target = $region48
        $region47: #{tpu_custom_call.1} parent=31 // pred_region
          %v379 = vld [vmem:[#allocation2] sm:$0xff]
          %v380 = vld [vmem:[#allocation2 + $0x8] sm:$0xff]
          %v381 = vld [vmem:[#allocation2 + $0x10] sm:$0xff]
          %v382 = vld [vmem:[#allocation2 + $0x18] sm:$0xff]
          %v383 = vld [vmem:[%s273] sm:$0x1]
          %v385 = vlaneseq
          %v386 = vshrl.u32 %v385, 7
          %v387 = vsub.s32 0, %v386
          %v388 = vrot.slane %v383, %v387
          %v390 = vadd.f32 %v379, %v388
          %v391 = vadd.f32 %v380, %v388
          %v392 = vadd.f32 %v381, %v388
          %v393 = vadd.f32 %v382, %v388
          %394 = vst [vmem:[%s268] sm:$0xff] %v390
          %395 = vst [vmem:[%s268 + $0x8] sm:$0xff] %v391
          %396 = vst [vmem:[%s268 + $0x10] sm:$0xff] %v392
          %397 = vst [vmem:[%s268 + $0x18] sm:$0xff] %v393
        $region48: #{tpu_custom_call.1} parent=31 // pred_fallthru
          _
        %s398 = sand.u32 %s134, 1
        %s399 = scalar_lea.sflag [#allocation5], %s398
        %s400 = sand.u32 %s134, 1
        %s401 = smul.addr %s400, 32
        %s402 = scalar_lea.vmem [#allocation8], %s401
        // Predicated region
        $region49: #{tpu_custom_call.1} parent=31 // pred_check
          %p403 = pneg %p144
        $region50: #{tpu_custom_call.1} parent=31 // pred_check_branch
          %405 = sbr.rel (%p403) target = $region52
        $region51: #{tpu_custom_call.1} parent=31 // pred_region
          %s406 = smul.u32 4, %s28
          %s408 = ssub.s32 512, 512
          %409 = vsyncadd %s399, %s408
          %s410 = smul.addr %s406, 6
          %s411 = sadd.s32 %s29, %s410
          %s412 = smul.addr %s411, 128
          %s413 = scalar_lea.hbm %s3, %s412
          %s414 = sshll.u32 %s402, 4
          %s415 = int_to_ptr.vmem [resolvable:$true] %s414
          %420 = dma.vmem_to_hbm [thread:$0]  %s415, 512, %s413, %s399, 128, 768, 8
        $region52: #{tpu_custom_call.1} parent=31 // pred_fallthru
          _
      $region32: #{tpu_custom_call.1} parent=5 // pred_fallthru
        _
      %p421 = scmp.le.s32.totalorder 2, %s18
      // Predicated region
      $region53: #{tpu_custom_call.1} parent=5 // pred_check
        %p422 = pneg %p421
      $region54: #{tpu_custom_call.1} parent=5 // pred_check_branch
        %424 = sbr.rel (%p422) target = $region56
      $region55: #{tpu_custom_call.1} parent=5 // pred_region
        %s425 = ssub.s32 %s18, 2
        // Predicated region
        $region57: #{tpu_custom_call.1} parent=55 // pred_check
          %p426 = pneg %p150
        $region58: #{tpu_custom_call.1} parent=55 // pred_check_branch
          %428 = sbr.rel (%p426) target = $region60
        $region59: #{tpu_custom_call.1} parent=55 // pred_region
          %s429 = sand.u32 %s135, 1
          %s430 = scalar_lea.sflag [#allocation5], %s429
          %s431 = sand.u32 %s135, 1
          %s432 = smul.addr %s431, 32
          %s433 = scalar_lea.vmem [#allocation8], %s432
          %434 = dma.done %s430, 512
        $region60: #{tpu_custom_call.1} parent=55 // pred_fallthru
          _
      $region56: #{tpu_custom_call.1} parent=5 // pred_fallthru
        _
    $region6: #{tpu_custom_call.1} parent=1 // loop_footer
      %s22 = sadd.s32 1, %s18
    $region7: #{tpu_custom_call.1} parent=1 // loop_footer_branch
      %17 = sbr.rel target = $region3
    $region8: #{tpu_custom_call.1} parent=1 // loop_exit
      _
    %435 = vsyncpa [#allocation4], 1
    %s436 = scalar_lea.sflag [#allocation4], 1
    %437 = vsyncpa %s436, 1
    %438 = vsyncpa [#allocation7], 1
    %s439 = scalar_lea.sflag [#allocation7], 1
    %440 = vsyncpa %s439, 1
    %441 = vsyncpa [#allocation5], 1
    %s442 = scalar_lea.sflag [#allocation5], 1
    %443 = vsyncpa %s442, 1

</llo_original>
